<compile_context>
chip_gen: v6e
topology: v6e:2x2x1
jax: 0.10.0
libtpu: 0.0.40
codegen_flags: <defaults>
</compile_context>

<pallas_src>
import functools

import numpy as np
import jax
import jax.numpy as jnp
from jax.experimental import pallas as pl
from jax.experimental.pallas import tpu as pltpu


_NEG_FILL = -1e30  # exp(_NEG_FILL) underflows to exactly 0 in f32


# ----------------------------------------------------------------------------
# Deterministic 'npair' batchminer (host-side Python, mirrors the reference
# miner but picks the first available positive instead of a random one).
# The npair rule fixes negatives = all indices except {anchor, positive},
# which the kernel reconstructs on-chip, so only (anchors, positives) are
# returned.  The miner emits at most one pair per batch row, so anchor
# indices are unique and can be row-aligned with the Gram matrix.
# ----------------------------------------------------------------------------
def npair_batchminer(labels):
    labels = np.asarray(labels)
    anchors, positives = [], []
    for i in range(len(labels)):
        same = np.where(labels == labels[i])[0]
        same = same[same != i]
        if len(same) == 0:
            continue
        anchors.append(i)
        positives.append(int(same[0]))  # deterministic choice
    return anchors, positives


# ----------------------------------------------------------------------------
# Pallas kernel: full n-pair loss for one batch in a single invocation.
# ----------------------------------------------------------------------------
def _npair_loss_kernel(p_idx_ref, batch_ref, out_ref, *,
                       l2_weight, mxu_dtype, precision):
    x = batch_ref[...]                              # (B, D) f32
    p_idx = p_idx_ref[...]                          # (B, 1) i32, -1 => not an anchor

    b = x.shape[0]
    col = jax.lax.broadcasted_iota(jnp.int32, (b, b), 1)
    row = jax.lax.broadcasted_iota(jnp.int32, (b, b), 0)

    # Single MXU matmul: Gram matrix G[i, j] = x_i . x_j.
    xm = x.astype(mxu_dtype)
    g = jax.lax.dot_general(
        xm, xm,
        dimension_numbers=(((1,), (1,)), ((), ())),
        preferred_element_type=jnp.float32,
        precision=precision,
    )                                               # (B, B) f32

    # a_i . p_i straight out of G (no positive matrix, no f32 one-hot buffer).
    ap = jnp.sum(jnp.where(col == p_idx, g, 0.0), axis=1, keepdims=True)  # (B,1)

    valid_row = p_idx >= 0                          # (B, 1) bool, anchor rows
    # npair negatives: every column except the anchor itself and its positive.
    # Non-anchor rows hold real similarities in Gram form, so they are masked
    # here as well -- BEFORE exp -- so nothing can overflow / NaN.
    neg_mask = valid_row & (col != row) & (col != p_idx)
    inner = jnp.where(neg_mask, g - ap, _NEG_FILL)  # (B, B)

    lse = jnp.log(jnp.sum(jnp.exp(inner), axis=1, keepdims=True) + 1.0)  # (B,1)
    valid_f = valid_row.astype(jnp.float32)
    k = jnp.sum(valid_f)                            # number of mined anchors
    pair_loss = jnp.sum(lse * valid_f, axis=0, keepdims=True) / k         # (1,1)

    # l2 term: each anchor adds l2_weight * mean(||x||) / K; summed over the K
    # anchors this is exactly l2_weight * mean_over_batch(||x||_2).
    norms = jnp.sqrt(jnp.sum(x * x, axis=1, keepdims=True))               # (B,1)
    l2_loss = (l2_weight / b) * jnp.sum(norms, axis=0, keepdims=True)     # (1,1)

    out_ref[...] = pair_loss + l2_loss


def npair_loss_pallas(batch, anchors, positives, *, l2_weight=0.005,
                      arch='resnet50', mxu_dtype=jnp.bfloat16,
                      precision=None):
    """batch: (B, D) float32 jax array. Returns scalar loss (float32).

    mxu_dtype=jnp.bfloat16 (default) runs the Gram matmul at native MXU rate
    on v5e/v6e/v7x.  mxu_dtype=jnp.float32 is a verification path and uses
    Precision.HIGHEST (multi-pass).
    """
    if 'bninception' in arch:
        batch = batch / 4.0
    batch = batch.astype(jnp.float32)

    B, D = batch.shape
    K = len(anchors)
    if K == 0:                      # reference loop never executes -> loss 0
        return jnp.float32(0.0)

    anchors_np = np.asarray(anchors, dtype=np.int32)
    positives_np = np.asarray(positives, dtype=np.int32)
    assert anchors_np.shape == positives_np.shape
    # Row-aligned Gram form requires unique anchor indices (the npair miner
    # guarantees this: at most one pair per batch row).
    assert len(np.unique(anchors_np)) == K, "duplicate anchors not supported"

    # Row-aligned positive index vector: p_vec[i] = positive of anchor i, -1
    # if row i is not an anchor.  O(B) int32 -- the only index data shipped.
    p_vec = np.full((B, 1), -1, dtype=np.int32)
    p_vec[anchors_np, 0] = positives_np

    if precision is None:
        precision = (jax.lax.Precision.HIGHEST if mxu_dtype == jnp.float32
                     else jax.lax.Precision.DEFAULT)

    kernel = functools.partial(
        _npair_loss_kernel,
        l2_weight=float(l2_weight), mxu_dtype=mxu_dtype, precision=precision)

    # Live-set estimate: batch (f32 + bf16 copy, double-buffered input) plus a
    # handful of (B, B) f32 temporaries (G, inner, exp, masks) + headroom.
    est = 3 * 4 * B * D + 8 * 4 * B * B + (2 << 20)
    vmem_limit = int(min(max(est, 16 << 20), 96 << 20))

    out = pl.pallas_call(
        kernel,
        grid=(1,),
        out_shape=jax.ShapeDtypeStruct((1, 1), jnp.float32),
        in_specs=[
            # block_shape == full array dims: legal even when unaligned, so no
            # host-side padded copy of the batch is needed.
            pl.BlockSpec((B, 1), lambda i: (0, 0)),      # row-aligned p_idx
            pl.BlockSpec((B, D), lambda i: (0, 0)),      # batch, as-is
        ],
        out_specs=pl.BlockSpec((1, 1), lambda i: (0, 0)),
        compiler_params=pltpu.CompilerParams(
            dimension_semantics=("arbitrary",),
            vmem_limit_bytes=vmem_limit),
    )(jnp.asarray(p_vec), batch)
    return out[0, 0]


# ----------------------------------------------------------------------------
# Pure-JAX reference (mirrors the PyTorch forward loop exactly).
# ----------------------------------------------------------------------------
def npair_loss_ref(batch, anchors, positives, *, l2_weight=0.005,
                   arch='resnet50'):
    if 'bninception' in arch:
        batch = batch / 4.0
    B = batch.shape[0]
    K = len(anchors)
    loss = jnp.float32(0.0)
    for a, p in zip(anchors, positives):
        neg = np.asarray([j for j in range(B) if j not in (a, p)],
                         dtype=np.int32)
        a_emb = batch[a:a + 1]                           # (1, D)
        p_emb = batch[p:p + 1]                           # (1, D)
        n_emb = batch[neg]                               # (N, D)
        inner = jnp.einsum('ad,nd->an', a_emb, n_emb - p_emb)       # (1, N)
        loss = loss + jnp.mean(jnp.log(jnp.sum(jnp.exp(inner), axis=1) + 1.0)) / K
        loss = loss + l2_weight * jnp.mean(
            jnp.sqrt(jnp.sum(batch * batch, axis=1))) / K
    return loss


if __name__ == "__main__":
    key = jax.random.PRNGKey(0)
    B, D = 8, 32
    batch = jax.random.normal(key, (B, D), dtype=jnp.float32)
    labels = np.array([0, 0, 1, 1, 2, 2, 3, 3])

    anchors, positives = npair_batchminer(labels)

    loss_ref = jax.block_until_ready(
        npair_loss_ref(batch, anchors, positives,
                       l2_weight=0.005, arch='resnet50'))

    # Default fast path: bf16 MXU inputs, f32 elementwise math -> loose check.
    loss_bf16 = jax.block_until_ready(
        npair_loss_pallas(batch, anchors, positives,
                          l2_weight=0.005, arch='resnet50'))
    assert np.allclose(np.asarray(loss_bf16), np.asarray(loss_ref),
                       rtol=5e-2, atol=5e-2), (loss_bf16, loss_ref)

    # Verification path: f32 MXU inputs at HIGHEST precision -> tight check.
    loss_f32 = jax.block_until_ready(
        npair_loss_pallas(batch, anchors, positives,
                          l2_weight=0.005, arch='resnet50',
                          mxu_dtype=jnp.float32))
    assert np.allclose(np.asarray(loss_f32), np.asarray(loss_ref),
                       rtol=1e-4, atol=1e-4), (loss_f32, loss_ref)

    print("KERNEL_OK")
</pallas_src>

<mosaic_0001>
module attributes {stable_mosaic.version = 11 : i64} {
  func.func @_npair_loss_kernel(%arg0: i32, %arg1: memref<8x1xi32, #tpu.memory_space<vmem>>, %arg2: memref<8x32xf32, #tpu.memory_space<vmem>>, %arg3: memref<1x1xf32, #tpu.memory_space<vmem>>) attributes {dimension_semantics = [#tpu.dimension_semantics<arbitrary>], iteration_bounds = array<i64: 1>, scalar_prefetch = 0 : i64, scratch_operands = 0 : i64, tpu.core_type = #tpu.core_type<tc>, window_params = [{pipeline_mode = #tpu.pipeline_mode<synchronous>, transform_indices = @transform_0, window_bounds = array<i64: 8, 1>}, {pipeline_mode = #tpu.pipeline_mode<synchronous>, transform_indices = @transform_1, window_bounds = array<i64: 8, 32>}, {pipeline_mode = #tpu.pipeline_mode<synchronous>, transform_indices = @transform_2, window_bounds = array<i64: 1, 1>}]} {
    %c0 = arith.constant 0 : index
    %c0_0 = arith.constant 0 : index
    %0 = vector.load %arg2[%c0, %c0_0] : memref<8x32xf32, #tpu.memory_space<vmem>>, vector<8x32xf32>
    %c0_1 = arith.constant 0 : index
    %c0_2 = arith.constant 0 : index
    %1 = vector.load %arg1[%c0_1, %c0_2] : memref<8x1xi32, #tpu.memory_space<vmem>>, vector<8x1xi32>
    %2 = tpu.iota {dimensions = array<i32: 1>} : vector<8x8xi32>
    %3 = tpu.iota {dimensions = array<i32: 0>} : vector<8x8xi32>
    %4 = arith.truncf %0 : vector<8x32xf32> to vector<8x32xbf16>
    %cst = arith.constant dense<0.000000e+00> : vector<8x8xf32>
    %5 = tpu.matmul %4, %4, %cst {dimension_numbers = #tpu.dot_dimension_numbers<[1], [1], [0], [0], [0, 0, 1, 0], [], []>} : vector<8x32xbf16>, vector<8x32xbf16>, vector<8x8xf32> -> vector<8x8xf32>
    %6 = vector.broadcast %1 : vector<8x1xi32> to vector<8x8xi32>
    %7 = arith.cmpi eq, %2, %6 : vector<8x8xi32>
    %cst_3 = arith.constant 0.000000e+00 : f32
    %8 = vector.broadcast %cst_3 : f32 to vector<8x8xf32>
    %9 = arith.select %7, %5, %8 : vector<8x8xi1>, vector<8x8xf32>
    %cst_4 = arith.constant dense<0.000000e+00> : vector<8xf32>
    %10 = vector.multi_reduction <add>, %9, %cst_4 [1] : vector<8x8xf32> to vector<8xf32>
    %11 = vector.shape_cast %10 : vector<8xf32> to vector<8x1xf32>
    %c0_i32 = arith.constant 0 : i32
    %12 = vector.broadcast %c0_i32 : i32 to vector<8x1xi32>
    %13 = arith.cmpi sge, %1, %12 : vector<8x1xi32>
    %14 = arith.cmpi ne, %2, %3 : vector<8x8xi32>
    %15 = vector.broadcast %13 : vector<8x1xi1> to vector<8x8xi1>
    %16 = arith.andi %15, %14 : vector<8x8xi1>
    %17 = vector.broadcast %1 : vector<8x1xi32> to vector<8x8xi32>
    %18 = arith.cmpi ne, %2, %17 : vector<8x8xi32>
    %19 = arith.andi %16, %18 : vector<8x8xi1>
    %20 = vector.broadcast %11 : vector<8x1xf32> to vector<8x8xf32>
    %21 = arith.subf %5, %20 : vector<8x8xf32>
    %cst_5 = arith.constant -1.000000e+30 : f32
    %22 = vector.broadcast %cst_5 : f32 to vector<8x8xf32>
    %23 = arith.select %19, %21, %22 : vector<8x8xi1>, vector<8x8xf32>
    %24 = math.exp %23 : vector<8x8xf32>
    %cst_6 = arith.constant dense<0.000000e+00> : vector<8xf32>
    %25 = vector.multi_reduction <add>, %24, %cst_6 [1] : vector<8x8xf32> to vector<8xf32>
    %26 = vector.shape_cast %25 : vector<8xf32> to vector<8x1xf32>
    %cst_7 = arith.constant 1.000000e+00 : f32
    %27 = vector.broadcast %cst_7 : f32 to vector<8x1xf32>
    %28 = arith.addf %26, %27 : vector<8x1xf32>
    %29 = math.log %28 : vector<8x1xf32>
    %30 = arith.extui %13 : vector<8x1xi1> to vector<8x1xi32>
    %31 = arith.sitofp %30 : vector<8x1xi32> to vector<8x1xf32>
    %32 = vector.shape_cast %31 : vector<8x1xf32> to vector<1x8x1xf32>
    %cst_8 = arith.constant dense<0.000000e+00> : vector<1xf32>
    %33 = vector.multi_reduction <add>, %32, %cst_8 [1, 2] : vector<1x8x1xf32> to vector<1xf32>
    %34 = vector.shape_cast %33 : vector<1xf32> to vector<1x1x1xf32>
    %35 = vector.extract %34[0, 0, 0] : f32 from vector<1x1x1xf32>
    %36 = arith.mulf %29, %31 : vector<8x1xf32>
    %cst_9 = arith.constant dense<0.000000e+00> : vector<1xf32>
    %37 = vector.multi_reduction <add>, %36, %cst_9 [0] : vector<8x1xf32> to vector<1xf32>
    %38 = vector.shape_cast %37 : vector<1xf32> to vector<1x1xf32>
    %39 = vector.broadcast %35 : f32 to vector<1x1xf32>
    %40 = arith.divf %38, %39 : vector<1x1xf32>
    %41 = arith.mulf %0, %0 : vector<8x32xf32>
    %cst_10 = arith.constant dense<0.000000e+00> : vector<8xf32>
    %42 = vector.multi_reduction <add>, %41, %cst_10 [1] : vector<8x32xf32> to vector<8xf32>
    %43 = vector.shape_cast %42 : vector<8xf32> to vector<8x1xf32>
    %44 = math.sqrt %43 : vector<8x1xf32>
    %cst_11 = arith.constant dense<0.000000e+00> : vector<1xf32>
    %45 = vector.multi_reduction <add>, %44, %cst_11 [0] : vector<8x1xf32> to vector<1xf32>
    %46 = vector.shape_cast %45 : vector<1xf32> to vector<1x1xf32>
    %cst_12 = arith.constant 6.250000e-04 : f32
    %47 = vector.broadcast %cst_12 : f32 to vector<1x1xf32>
    %48 = arith.mulf %47, %46 : vector<1x1xf32>
    %49 = arith.addf %40, %48 : vector<1x1xf32>
    %c0_13 = arith.constant 0 : index
    %c0_14 = arith.constant 0 : index
    %50 = vector.load %arg3[%c0_13, %c0_14] : memref<1x1xf32, #tpu.memory_space<vmem>>, vector<1x1xf32>
    tpu.vector_store %arg3[%c0_13, %c0_14], %49 {strides = array<i32>} : memref<1x1xf32, #tpu.memory_space<vmem>>, vector<1x1xf32>,
    return
  }
  func.func @transform_0(%arg0: i32) -> (i32, i32) {
    %c0_i32 = arith.constant 0 : i32
    %c0_i32_0 = arith.constant 0 : i32
    %c0_i32_1 = arith.constant 0 : i32
    return %c0_i32, %c0_i32_0 : i32, i32
  }
  func.func @transform_1(%arg0: i32) -> (i32, i32) {
    %c0_i32 = arith.constant 0 : i32
    %c0_i32_0 = arith.constant 0 : i32
    %c0_i32_1 = arith.constant 0 : i32
    return %c0_i32, %c0_i32_0 : i32, i32
  }
  func.func @transform_2(%arg0: i32) -> (i32, i32) {
    %c0_i32 = arith.constant 0 : i32
    %c0_i32_0 = arith.constant 0 : i32
    %c0_i32_1 = arith.constant 0 : i32
    return %c0_i32, %c0_i32_0 : i32, i32
  }
}

</mosaic_0001>

<llo_original>
// kernel: tpu_custom_call.1
$region0: #{tpu_custom_call.1}
  #allocation0 [shape = 'u32[]', space=smem, size = 0x4, offset = 0x4, fixed_abs, tag = 'smem constant byte address 0x4 - core index']
  #allocation1 [shape = 'u32[144,128]{1,0:T(1,128)}', space=vmem, size = 0x12000, scoped, tag = 'internal scratch']
  %s0 = inlined_call_operand.vmem [shape: s32[8,1], index: 0, kind: input, shape index: {}]
  %s1 = inlined_call_operand.vmem [shape: f32[8,32], index: 1, kind: input, shape index: {}]
  %s2 = inlined_call_operand.hbm [shape: f32[1,1], index: 2, kind: output, shape index: {}]
  %s3 = sld [smem:[#allocation0]]
  $region18: #{tpu_custom_call.1} parent=0
    _
  %s5 = ssub.s32 1, %s3
  %s6 = scalar_select 0, %s5, %s3
  $region1: #{tpu_custom_call.1} parent=0
    #allocation2 [shape = 'u8[512]{0}', space=vmem, size = 0x400, scoped, tag = 'output window, operand 0, single buffered']
    #allocation3 [shape = 's32[1]{0}', space=sflag, size = 0x4, scoped, tag = 'scoped memory for tpu_custom_call.1']
    %7 = vsyncpa [#allocation3], 0
    // Predicated region
    $region2: #{tpu_custom_call.1} parent=1 // pred_check
      _
    $region3: #{tpu_custom_call.1} parent=1 // pred_check_branch
      %9 = sbr.rel (0) target = $region5
    $region4: #{tpu_custom_call.1} parent=1 // pred_region
      _
    $region5: #{tpu_custom_call.1} parent=1 // pred_fallthru
      _
    // Predicated region
    $region6: #{tpu_custom_call.1} parent=1 // pred_check
      _
    $region7: #{tpu_custom_call.1} parent=1 // pred_check_branch
      %11 = sbr.rel (0) target = $region9
    $region8: #{tpu_custom_call.1} parent=1 // pred_region
      _
    $region9: #{tpu_custom_call.1} parent=1 // pred_fallthru
      _
    %v13 = vld [vmem:[%s1] sm:$0xff]
    %v14 = vld [vmem:[%s0] sm:$0xff]
    %v15 = vlaneseq
    %v16 = vand.u32 %v15, 127
    %v17 = vlaneseq
    %v18 = vshrl.u32 %v17, 7
    %v19 = vpack.c.bf16 %v13, %v13
    %vm20 = vcmask 261120
    %v22 = vsel %vm20, %v19, 0
    %24 = vmatprep.subr.bf16.mxu0 0
    %25 = vmatpush1.bf16.xpose.msra.mxu0 0
    %26 = vmatprep.subr.bf16.mxu0 0
    %27 = vmatpush1.bf16.xpose.msra.mxu0 0
    %28 = vmatprep.subr.bf16.mxu0 0
    %29 = vmatpush1.bf16.xpose.msra.mxu0 0
    %30 = vmatprep.subr.bf16.mxu0 0
    %31 = vmatpush1.bf16.xpose.msra.mxu0 0
    %32 = vmatprep.subr.bf16.mxu0 0
    %33 = vmatpush1.bf16.xpose.msra.mxu0 0
    %34 = vmatprep.subr.bf16.mxu0 0
    %35 = vmatpush1.bf16.xpose.msra.mxu0 0
    %36 = vmatprep.subr.bf16.mxu0 0
    %37 = vmatpush1.bf16.xpose.msra.mxu0 0
    %38 = vmatprep.subr.bf16.mxu0 0
    %39 = vmatpush1.bf16.xpose.msra.mxu0 %v22
    %40 = vmatprep.subr.bf16.mxu0 0
    %41 = vmatpush2.bf16.xpose.msra.mxu0 0
    %42 = vmatprep.subr.bf16.mxu0 0
    %43 = vmatpush2.bf16.xpose.msra.mxu0 0
    %44 = vmatprep.subr.bf16.mxu0 0
    %45 = vmatpush2.bf16.xpose.msra.mxu0 0
    %46 = vmatprep.subr.bf16.mxu0 0
    %47 = vmatpush2.bf16.xpose.msra.mxu0 0
    %48 = vmatprep.subr.bf16.mxu0 0
    %49 = vmatpush2.bf16.xpose.msra.mxu0 0
    %50 = vmatprep.subr.bf16.mxu0 0
    %51 = vmatpush2.bf16.xpose.msra.mxu0 0
    %52 = vmatprep.subr.bf16.mxu0 0
    %53 = vmatpush2.bf16.xpose.msra.mxu0 0
    %54 = vmatprep.subr.bf16.mxu0 0
    %55 = vmatpush2.bf16.xpose.msra.mxu0 0
    %56 = vmatprep.mubr.bf16.mxu0 0
    %57 = vmatmul.mubr.bf16.gmra.mxu0 %v22
    %v58 = vpop.f32.mrf.mxu0
    %v59 = vadd.f32 0.0, %v58
    %v60 = vpop.f32.mrf.mxu0
    %v61 = vpop.f32.mrf.mxu0
    %v62 = vpop.f32.mrf.mxu0
    %63 = vdwg.mxu0
    %64 = vset.pattern.permute.xlu0 0
    %65 = vperm.xlu0 %64, %v14
    %v66 = vpop.permute.xlu0 %65
    %vm67 = vcmp.eq.s32.totalorder %v16, %v66
    %v68 = vsel %vm67, %v59, 0.0
    %vm69 = vcmask 64512
    %v70 = vsel %vm69, %v68, 0.0
    %71 = vadd.xlane.f32.xlu0 %v70
    %v72 = vpop.xlane.xlu0 %71
    %vm73 = vcmp.ge.s32.totalorder %v14, 0
    %vm74 = vcmp.ne.s32.totalorder %v16, %v18
    %v75 = vsel %vm73, 1, 0
    %76 = vset.pattern.permute.xlu0 0
    %77 = vperm.xlu0 %76, %v75
    %v78 = vpop.permute.xlu0 %77
    %vm79 = vcmp.eq.s32.totalorder %v78, 1
    %vm80 = vmand %vm79, %vm74
    %vm81 = vcmp.ne.s32.totalorder %v16, %v66
    %vm82 = vmand %vm80, %vm81
    %v83 = vsub.f32 %v59, %v72
    %v84 = vsel %vm82, %v83, -1e+30
    %v85 = vmul.f32 %v84, 1.442695
    %v86 = vpow.pop %v85
    %v87 = vsel %vm69, %v86, 0.0
    %88 = vadd.xlane.f32.xlu0 %v87
    %v89 = vpop.xlane.xlu0 %88
    %v90 = vadd.f32 %v89, 1.0
    %v91 = vlog2.pop %v90
    %v92 = vmul.f32 %v91, 0.6931472
    %v93 = vcvt.s32.f32 %v75
    %vm94 = vcmask 7168
    %v95 = vsel %vm94, %v93, 0.0
    %96 = vadd.xlane.f32.xlu0 %v95
    %v97 = vpop.xlane.xlu0 %96
    %v98 = vrot.slane %v97, 4
    %v99 = vadd.f32 %v97, %v98
    %v100 = vrot.slane %v99, 2
    %v101 = vadd.f32 %v99, %v100
    %v102 = vrot.slane %v101, 1
    %v103 = vadd.f32 %v101, %v102
    %s104 = vtos %v103
    %v105 = vmul.f32 %v92, %v93
    %v106 = vsel %vm94, %v105, 0.0
    %v107 = vrot.slane %v106, 4
    %v108 = vadd.f32 %v106, %v107
    %v109 = vrot.slane %v108, 2
    %v110 = vadd.f32 %v108, %v109
    %v111 = vrot.slane %v110, 1
    %v112 = vadd.f32 %v110, %v111
    %v113 = vstv %s104
    %v114 = vrcp.pop %v113
    %v115 = vmul.f32 %v112, %v114
    %v116 = vmul.f32 %v13, %v13
    %v117 = vsel %vm20, %v116, 0.0
    %118 = vadd.xlane.f32.xlu0 %v117
    %v119 = vpop.xlane.xlu0 %118
    %v120 = vrsqrt.pop %v119
    %v121 = vmul.f32 %v119, %v120
    %vm122 = vcmp.eq.f32.partialorder %v119, inf
    %v123 = vsel %vm122, %v119, %v121
    %vm124 = vcmp.eq.f32.partialorder %v119, 0.0
    %v125 = vand.u32 %v119, 2147483648
    %v126 = vsel %vm124, %v125, %v123
    %v127 = vrot.slane %v126, 4
    %v128 = vadd.f32 %v126, %v127
    %v129 = vrot.slane %v128, 2
    %v130 = vadd.f32 %v128, %v129
    %v131 = vrot.slane %v130, 1
    %v132 = vadd.f32 %v130, %v131
    %v133 = vmul.f32 %v132, 0.000625
    %v134 = vadd.f32 %v115, %v133
    %vm135 = vcmask 0
    %136 = vst.msk [vmem:[#allocation2] sm:$0x1] %vm135, %v134
    // Predicated region
    $region10: #{tpu_custom_call.1} parent=1 // pred_check
      _
    $region11: #{tpu_custom_call.1} parent=1 // pred_check_branch
      %138 = sbr.rel (0) target = $region13
    $region12: #{tpu_custom_call.1} parent=1 // pred_region
      %s140 = ssub.s32 16, 16
      %141 = vsyncadd [#allocation3], %s140
      %s143 = sshll.u32 [#allocation2], 4
      %s144 = int_to_ptr.vmem [resolvable:$true] %s143
      %146 = dma.vmem_to_hbm [thread:$0]  %s144, 16, %s2, [#allocation3]
    $region13: #{tpu_custom_call.1} parent=1 // pred_fallthru
      _
    // Predicated region
    $region14: #{tpu_custom_call.1} parent=1 // pred_check
      _
    $region15: #{tpu_custom_call.1} parent=1 // pred_check_branch
      %148 = sbr.rel (0) target = $region17
    $region16: #{tpu_custom_call.1} parent=1 // pred_region
      %149 = dma.done [#allocation3], 16
    $region17: #{tpu_custom_call.1} parent=1 // pred_fallthru
      _
    %150 = vsyncpa [#allocation3], 1

</llo_original>
